<compile_context>
chip_gen: v6e
topology: v6e:2x2x1
jax: 0.10.0
libtpu: 0.0.40
codegen_flags: <defaults>
</compile_context>

<pallas_src>
import functools

import jax
import jax.numpy as jnp
from jax.experimental import pallas as pl
from jax.experimental.pallas import tpu as pltpu


# ---------------------------------------------------------------------------
# Pallas kernel: fused conv3x3 (4 wide matmuls) + 2x2/2 max-pool + bias + ReLU,
# B_TILE images per grid step, batch folded into the lane dimension.
# ---------------------------------------------------------------------------
def _conv_relu_pool_kernel(x_ref, w_ref, b_ref, o_ref, *, K3):
    """
    x_ref: (1, 2, 4*K3, L) bf16, L = B_TILE*Ho*Wo.
           x_ref[0, px, s*K3 + kx*Cin + c, b*Ho*Wo + i*Wo + j]
             = xpad[b, 2*i + s, 2*j + px + kx, c]        (s = py + ky in 0..3)
    w_ref: (Cout, 3*K3) bf16, row ordering ky*K3 + kx*Cin + c.
    b_ref: (Cout, 1)    f32.
    o_ref: (1, Cout, L) f32 pooled output; lanes = b*Ho*Wo + i*Wo + j.
    """
    w = w_ref[...]                                         # (Cout, 3*K3) bf16
    pooled = None
    for px in range(2):                                    # pooling-window column member
        plane = x_ref[0, px, :, :]                         # (4*K3, L) bf16, VMEM resident
        for py in range(2):                                # pooling-window row member
            # taps ky=0..2 are the contiguous row range [py*K3, py*K3 + 3*K3)
            rhs = plane[py * K3: py * K3 + 3 * K3, :]      # (3*K3, L) bf16
            acc = jnp.dot(w, rhs, preferred_element_type=jnp.float32)   # MXU, f32 accum
            pooled = acc if pooled is None else jnp.maximum(pooled, acc)
    # bias + ReLU after the max (equivalent: shared per-channel bias, monotone ReLU)
    o_ref[0, :, :] = jnp.maximum(pooled + b_ref[...], 0.0).astype(o_ref.dtype)


# ---------------------------------------------------------------------------
# Glue: layout prep in plain XLA (~3x the raw input in bf16, not a 9x im2col)
# ---------------------------------------------------------------------------
def _prep_input(x_nchw, b_tile):
    """NCHW f32 -> (G, 2, 4*K3, B_TILE*Ho*Wo) bf16 in the kernel's layout."""
    N, Cin, H, W = x_nchw.shape
    assert N % b_tile == 0
    assert H % 2 == 0 and W % 2 == 0, "MaxPool2d(2,2) path assumes even H, W"
    Ho, Wo, K3 = H // 2, W // 2, 3 * Cin

    x = jnp.transpose(x_nchw, (0, 2, 3, 1)).astype(jnp.bfloat16)          # NHWC bf16
    xp = jnp.pad(x, ((0, 0), (1, 1), (1, 1), (0, 0)))                     # padding = 1
    # kx-unfold along columns: xk[n, h, w, kx*Cin + c] = xp[n, h, w + kx, c]
    xk = jnp.concatenate([xp[:, :, kx:kx + W, :] for kx in range(3)], axis=-1)
    # split columns by output-column parity: w = 2j + px
    xk = xk.reshape(N, H + 2, Wo, 2, K3)                                  # [n, h, j, px, k]
    # s-unfold along rows (s = py + ky in 0..3): rows 2i + s for i in [0, Ho)
    xs = jnp.stack([xk[:, s:s + 2 * Ho:2] for s in range(4)], axis=1)     # [n, s, i, j, px, k]
    # -> (n, px, s, k, i, j) -> (N, 2, 4*K3, Ho*Wo)
    xs = jnp.transpose(xs, (0, 4, 1, 5, 2, 3)).reshape(N, 2, 4 * K3, Ho * Wo)

    # fold the batch tile into the lane dimension: lane = b_local*Ho*Wo + pixel
    G = N // b_tile
    xs = xs.reshape(G, b_tile, 2, 4 * K3, Ho * Wo)
    xs = jnp.transpose(xs, (0, 2, 3, 1, 4)).reshape(G, 2, 4 * K3, b_tile * Ho * Wo)
    return xs, (Ho, Wo)


def convnet_forward(x_nchw, w_conv, b_conv, *, b_tile_max=32):
    """Equivalent of ConvNet.forward: conv(3->16,k3,s1,p1) -> ReLU -> maxpool 2x2."""
    N, Cin, H, W = x_nchw.shape
    Cout = w_conv.shape[0]
    K3 = 3 * Cin
    Ho, Wo = H // 2, W // 2
    HoWo = Ho * Wo

    # Batch tile: as large as possible, capped so double-buffered in+out blocks stay
    # well inside VMEM on every generation (v7x has only 64 MiB physical).
    per_img = 2 * (2 * 4 * K3 * HoWo * 2 + Cout * HoWo * 4)   # 2x-buffered in + out bytes
    b_tile = int(max(1, min(b_tile_max, N, (40 * 2 ** 20) // max(per_img, 1))))
    # NOTE: for v7x throughput keep N // b_tile >= 2 so both TensorCores get work.

    n_pad = -(-N // b_tile) * b_tile
    if n_pad != N:
        x_nchw = jnp.pad(x_nchw, ((0, n_pad - N), (0, 0), (0, 0), (0, 0)))

    xs, (Ho, Wo) = _prep_input(x_nchw, b_tile)
    G = n_pad // b_tile
    L = b_tile * HoWo

    # (Cout, Cin, ky, kx) -> (Cout, ky*K3 + kx*Cin + c), matching the rhs K ordering.
    w_flat = jnp.transpose(w_conv, (0, 2, 3, 1)).reshape(Cout, 3 * K3).astype(jnp.bfloat16)
    b_col = b_conv.reshape(Cout, 1).astype(jnp.float32)

    x_blk_bytes = 2 * 4 * K3 * L * 2
    o_blk_bytes = Cout * L * 4
    vmem_limit = int(min(48 * 2 ** 20,
                         max(8 * 2 ** 20, 4 * (x_blk_bytes + o_blk_bytes))))

    kernel = functools.partial(_conv_relu_pool_kernel, K3=K3)
    out = pl.pallas_call(
        kernel,
        out_shape=jax.ShapeDtypeStruct((G, Cout, L), jnp.float32),
        grid=(G,),
        in_specs=[
            pl.BlockSpec((1, 2, 4 * K3, L), lambda g: (g, 0, 0, 0)),
            pl.BlockSpec((Cout, 3 * K3), lambda g: (0, 0)),
            pl.BlockSpec((Cout, 1), lambda g: (0, 0)),
        ],
        out_specs=pl.BlockSpec((1, Cout, L), lambda g: (g, 0, 0)),
        compiler_params=pltpu.CompilerParams(
            dimension_semantics=("parallel",),
            vmem_limit_bytes=vmem_limit),
    )(xs, w_flat, b_col)

    # (G, Cout, b_tile*Ho*Wo) -> (N, Cout, Ho, Wo): cheap wrapper-side un-fold; the
    # lane-dense store inside the kernel is worth this small output transpose.
    out = out.reshape(G, Cout, b_tile, Ho, Wo)
    out = jnp.transpose(out, (0, 2, 1, 3, 4)).reshape(n_pad, Cout, Ho, Wo)
    return out[:N]


# ---------------------------------------------------------------------------
# Reference (pure XLA) for a correctness check
# ---------------------------------------------------------------------------
def convnet_reference(x_nchw, w_conv, b_conv):
    y = jax.lax.conv_general_dilated(
        x_nchw, w_conv, window_strides=(1, 1), padding="SAME",
        dimension_numbers=("NCHW", "OIHW", "NCHW"))
    y = jnp.maximum(y + b_conv.reshape(1, -1, 1, 1), 0.0)
    y = jax.lax.reduce_window(y, -jnp.inf, jax.lax.max,
                              (1, 1, 2, 2), (1, 1, 2, 2), "VALID")
    return y


if __name__ == "__main__":
    key = jax.random.PRNGKey(0)
    kw, kb, kx = jax.random.split(key, 3)

    Cin, Cout = 3, 16
    fan_in = Cin * 3 * 3
    bound = (1.0 / fan_in) ** 0.5  # PyTorch default Conv2d init range
    w_conv = jax.random.uniform(kw, (Cout, Cin, 3, 3), jnp.float32, -bound, bound)
    b_conv = jax.random.uniform(kb, (Cout,), jnp.float32, -bound, bound)

    # small NCHW input consistent with conv1's 3 input channels
    x = jax.random.normal(kx, (2, 3, 16, 16), jnp.float32)

    out = jax.jit(convnet_forward)(x, w_conv, b_conv)
    out = jax.block_until_ready(out)

    ref = convnet_reference(x, w_conv, b_conv)
    assert out.shape == ref.shape == (2, 16, 8, 8), (out.shape, ref.shape)
    # Tolerance accounts for the (documented) bf16 MXU operands; accumulation is f32.
    assert jnp.allclose(out, ref, atol=2e-2, rtol=2e-2), \
        float(jnp.max(jnp.abs(out - ref)))

    print("KERNEL_OK")
</pallas_src>

<mosaic_0001>
module attributes {stable_mosaic.version = 11 : i64} {
  func.func @_conv_relu_pool_kernel(%arg0: i32, %arg1: memref<1x2x36x128xbf16, #tpu.memory_space<vmem>>, %arg2: memref<16x27xbf16, #tpu.memory_space<vmem>>, %arg3: memref<16x1xf32, #tpu.memory_space<vmem>>, %arg4: memref<1x16x128xf32, #tpu.memory_space<vmem>>) attributes {dimension_semantics = [#tpu.dimension_semantics<parallel>], iteration_bounds = array<i64: 1>, scalar_prefetch = 0 : i64, scratch_operands = 0 : i64, tpu.core_type = #tpu.core_type<tc>, window_params = [{transform_indices = @transform_0, window_bounds = array<i64: 1, 2, 36, 128>}, {pipeline_mode = #tpu.pipeline_mode<synchronous>, transform_indices = @transform_1, window_bounds = array<i64: 16, 27>}, {pipeline_mode = #tpu.pipeline_mode<synchronous>, transform_indices = @transform_2, window_bounds = array<i64: 16, 1>}, {transform_indices = @transform_3, window_bounds = array<i64: 1, 16, 128>}]} {
    %c0 = arith.constant 0 : index
    %c0_0 = arith.constant 0 : index
    %0 = vector.load %arg2[%c0, %c0_0] : memref<16x27xbf16, #tpu.memory_space<vmem>>, vector<16x27xbf16>
    %c0_1 = arith.constant 0 : index
    %c0_2 = arith.constant 0 : index
    %c0_3 = arith.constant 0 : index
    %c0_4 = arith.constant 0 : index
    %1 = vector.load %arg1[%c0_1, %c0_2, %c0_3, %c0_4] : memref<1x2x36x128xbf16, #tpu.memory_space<vmem>>, vector<1x1x36x128xbf16>
    %2 = vector.shape_cast %1 : vector<1x1x36x128xbf16> to vector<36x128xbf16>
    %3 = vector.extract_strided_slice %2 {offsets = [0, 0], sizes = [27, 128], strides = [1, 1]} : vector<36x128xbf16> to vector<27x128xbf16>
    %cst = arith.constant dense<0.000000e+00> : vector<16x128xf32>
    %4 = tpu.matmul %0, %3, %cst {dimension_numbers = #tpu.dot_dimension_numbers<[1], [0], [0], [1], [0, 0, 1, 1], [], []>} : vector<16x27xbf16>, vector<27x128xbf16>, vector<16x128xf32> -> vector<16x128xf32>
    %5 = vector.extract_strided_slice %2 {offsets = [9, 0], sizes = [27, 128], strides = [1, 1]} : vector<36x128xbf16> to vector<27x128xbf16>
    %cst_5 = arith.constant dense<0.000000e+00> : vector<16x128xf32>
    %6 = tpu.matmul %0, %5, %cst_5 {dimension_numbers = #tpu.dot_dimension_numbers<[1], [0], [0], [1], [0, 0, 1, 1], [], []>} : vector<16x27xbf16>, vector<27x128xbf16>, vector<16x128xf32> -> vector<16x128xf32>
    %7 = arith.maximumf %4, %6 : vector<16x128xf32>
    %c0_6 = arith.constant 0 : index
    %c1 = arith.constant 1 : index
    %c0_7 = arith.constant 0 : index
    %c0_8 = arith.constant 0 : index
    %8 = vector.load %arg1[%c0_6, %c1, %c0_7, %c0_8] : memref<1x2x36x128xbf16, #tpu.memory_space<vmem>>, vector<1x1x36x128xbf16>
    %9 = vector.shape_cast %8 : vector<1x1x36x128xbf16> to vector<36x128xbf16>
    %10 = vector.extract_strided_slice %9 {offsets = [0, 0], sizes = [27, 128], strides = [1, 1]} : vector<36x128xbf16> to vector<27x128xbf16>
    %cst_9 = arith.constant dense<0.000000e+00> : vector<16x128xf32>
    %11 = tpu.matmul %0, %10, %cst_9 {dimension_numbers = #tpu.dot_dimension_numbers<[1], [0], [0], [1], [0, 0, 1, 1], [], []>} : vector<16x27xbf16>, vector<27x128xbf16>, vector<16x128xf32> -> vector<16x128xf32>
    %12 = arith.maximumf %7, %11 : vector<16x128xf32>
    %13 = vector.extract_strided_slice %9 {offsets = [9, 0], sizes = [27, 128], strides = [1, 1]} : vector<36x128xbf16> to vector<27x128xbf16>
    %cst_10 = arith.constant dense<0.000000e+00> : vector<16x128xf32>
    %14 = tpu.matmul %0, %13, %cst_10 {dimension_numbers = #tpu.dot_dimension_numbers<[1], [0], [0], [1], [0, 0, 1, 1], [], []>} : vector<16x27xbf16>, vector<27x128xbf16>, vector<16x128xf32> -> vector<16x128xf32>
    %15 = arith.maximumf %12, %14 : vector<16x128xf32>
    %c0_11 = arith.constant 0 : index
    %c0_12 = arith.constant 0 : index
    %16 = vector.load %arg3[%c0_11, %c0_12] : memref<16x1xf32, #tpu.memory_space<vmem>>, vector<16x1xf32>
    %17 = vector.broadcast %16 : vector<16x1xf32> to vector<16x128xf32>
    %18 = arith.addf %15, %17 : vector<16x128xf32>
    %cst_13 = arith.constant 0.000000e+00 : f32
    %19 = vector.broadcast %cst_13 : f32 to vector<16x128xf32>
    %20 = arith.maximumf %18, %19 : vector<16x128xf32>
    %c0_14 = arith.constant 0 : index
    %c0_15 = arith.constant 0 : index
    %c0_16 = arith.constant 0 : index
    %21 = vector.load %arg4[%c0_14, %c0_15, %c0_16] : memref<1x16x128xf32, #tpu.memory_space<vmem>>, vector<1x16x128xf32>
    %22 = vector.shape_cast %21 : vector<1x16x128xf32> to vector<16x128xf32>
    %23 = vector.shape_cast %20 : vector<16x128xf32> to vector<1x16x128xf32>
    tpu.vector_store %arg4[%c0_14, %c0_15, %c0_16], %23 {strides = array<i32>} : memref<1x16x128xf32, #tpu.memory_space<vmem>>, vector<1x16x128xf32>,
    return
  }
  func.func @transform_0(%arg0: i32) -> (i32, i32, i32, i32) {
    %c0_i32 = arith.constant 0 : i32
    %c0_i32_0 = arith.constant 0 : i32
    %c0_i32_1 = arith.constant 0 : i32
    %c0_i32_2 = arith.constant 0 : i32
    return %arg0, %c0_i32, %c0_i32_0, %c0_i32_1 : i32, i32, i32, i32
  }
  func.func @transform_1(%arg0: i32) -> (i32, i32) {
    %c0_i32 = arith.constant 0 : i32
    %c0_i32_0 = arith.constant 0 : i32
    %c0_i32_1 = arith.constant 0 : i32
    return %c0_i32, %c0_i32_0 : i32, i32
  }
  func.func @transform_2(%arg0: i32) -> (i32, i32) {
    %c0_i32 = arith.constant 0 : i32
    %c0_i32_0 = arith.constant 0 : i32
    %c0_i32_1 = arith.constant 0 : i32
    return %c0_i32, %c0_i32_0 : i32, i32
  }
  func.func @transform_3(%arg0: i32) -> (i32, i32, i32) {
    %c0_i32 = arith.constant 0 : i32
    %c0_i32_0 = arith.constant 0 : i32
    %c0_i32_1 = arith.constant 0 : i32
    return %arg0, %c0_i32, %c0_i32_0 : i32, i32, i32
  }
}

</mosaic_0001>

<llo_original>
// kernel: convnet_forward.1
$region0: #{convnet_forward.1}
  #allocation0 [shape = 'u32[]', space=smem, size = 0x4, offset = 0x4, fixed_abs, tag = 'smem constant byte address 0x4 - core index']
  #allocation1 [shape = 'u32[144,128]{1,0:T(1,128)}', space=vmem, size = 0x12000, scoped, tag = 'internal scratch']
  %s0 = inlined_call_operand.vmem [shape: bf16[1,2,36,128], index: 0, kind: input, shape index: {}]
  %s1 = inlined_call_operand.vmem [shape: bf16[16,27], index: 1, kind: input, shape index: {}]
  %s2 = inlined_call_operand.vmem [shape: f32[16,1], index: 2, kind: input, shape index: {}]
  %s3 = inlined_call_operand.vmem [shape: f32[1,16,128], index: 3, kind: output, shape index: {}]
  %s4 = sld [smem:[#allocation0]]
  $region22: #{convnet_forward.1} parent=0
    _
  %s6 = ssub.s32 1, %s4
  %s7 = scalar_select 0, %s6, %s4
  // Predicated region
  $region2: #{convnet_forward.1} parent=0 // pred_check
    _
  $region3: #{convnet_forward.1} parent=0 // pred_check_branch
    %9 = sbr.rel (0) target = $region5
  $region4: #{convnet_forward.1} parent=0 // pred_region
    _
  $region5: #{convnet_forward.1} parent=0 // pred_fallthru
    _
  // Predicated region
  $region6: #{convnet_forward.1} parent=0 // pred_check
    _
  $region7: #{convnet_forward.1} parent=0 // pred_check_branch
    %11 = sbr.rel (0) target = $region9
  $region8: #{convnet_forward.1} parent=0 // pred_region
    _
  $region9: #{convnet_forward.1} parent=0 // pred_fallthru
    _
  // Predicated region
  $region10: #{convnet_forward.1} parent=0 // pred_check
    _
  $region11: #{convnet_forward.1} parent=0 // pred_check_branch
    %13 = sbr.rel (0) target = $region13
  $region12: #{convnet_forward.1} parent=0 // pred_region
    _
  $region13: #{convnet_forward.1} parent=0 // pred_fallthru
    _
  %v15 = vld [vmem:[%s1] sm:$0xf]
  %v16 = vld [vmem:[%s1 + $0x4] sm:$0xf]
  %v17 = vld [vmem:[%s0] sm:$0xf]
  %v18 = vld [vmem:[%s0 + $0x4] sm:$0xf]
  %v19 = vld [vmem:[%s0 + $0x8] sm:$0xf]
  %v20 = vld [vmem:[%s0 + $0xc] sm:$0xf]
  %v21 = vld [vmem:[%s0 + $0x10] sm:$0x3]
  %v24 = vunpack.c.l.b16 %v15
  %v25 = vunpack.c.l.b16 %v16
  %v26 = vpack.c.b16 %v25, %v24
  %v31 = vunpack.c.l.b16 %v17
  %v32 = vunpack.c.l.b16 %v18
  %v33 = vunpack.c.l.b16 %v19
  %v34 = vunpack.c.l.b16 %v20
  %v35 = vpack.c.b16 %v32, %v31
  %v36 = vpack.c.b16 %v34, %v33
  %vm38 = vcmask 220160
  %v40 = vsel %vm38, %v26, 0
  %vm42 = vcmask 1044480
  %vm43 = vcmask 1045504
  %v44 = vsel %vm42, 4294967295, 65535
  %v45 = vsel %vm43, %v44, 0
  %v47 = vand.u32 %v36, %v45
  %49 = vmatprep.subr.bf16.mxu0 0
  %50 = vmatpush1.bf16.msra.mxu0 0
  %51 = vmatprep.subr.bf16.mxu0 0
  %52 = vmatpush1.bf16.msra.mxu0 0
  %53 = vmatprep.subr.bf16.mxu0 0
  %54 = vmatpush1.bf16.msra.mxu0 0
  %55 = vmatprep.subr.bf16.mxu0 0
  %56 = vmatpush1.bf16.msra.mxu0 0
  %57 = vmatprep.subr.bf16.mxu0 0
  %58 = vmatpush1.bf16.msra.mxu0 0
  %59 = vmatprep.subr.bf16.mxu0 0
  %60 = vmatpush1.bf16.msra.mxu0 0
  %61 = vmatprep.subr.bf16.mxu0 0
  %62 = vmatpush1.bf16.msra.mxu0 %v47
  %63 = vmatprep.subr.bf16.mxu0 0
  %64 = vmatpush1.bf16.msra.mxu0 %v35
  %65 = vmatprep.subr.bf16.mxu0 0
  %66 = vmatpush2.bf16.msra.mxu0 0
  %67 = vmatprep.subr.bf16.mxu0 0
  %68 = vmatpush2.bf16.msra.mxu0 0
  %69 = vmatprep.subr.bf16.mxu0 0
  %70 = vmatpush2.bf16.msra.mxu0 0
  %71 = vmatprep.subr.bf16.mxu0 0
  %72 = vmatpush2.bf16.msra.mxu0 0
  %73 = vmatprep.subr.bf16.mxu0 0
  %74 = vmatpush2.bf16.msra.mxu0 0
  %75 = vmatprep.subr.bf16.mxu0 0
  %76 = vmatpush2.bf16.msra.mxu0 0
  %77 = vmatprep.subr.bf16.mxu0 0
  %78 = vmatpush2.bf16.msra.mxu0 0
  %79 = vmatprep.subr.bf16.mxu0 0
  %80 = vmatpush2.bf16.msra.mxu0 0
  %81 = vmatprep.mubr.bf16.mxu0 0
  %82 = vmatmul.mubr.bf16.gmra.mxu0 %v40
  %v83 = vpop.f32.mrf.mxu0
  %v84 = vadd.f32 0.0, %v83
  %v85 = vpop.f32.mrf.mxu0
  %v86 = vpop.f32.mrf.mxu0
  %v87 = vadd.f32 0.0, %v86
  %v88 = vpop.f32.mrf.mxu0
  %89 = vdwg.mxu0
  %v91 = vunpack.c.l.b16 %v21
  %v92 = vpack.c.b16 %v33, %v32
  %v93 = vpack.c.b16 %v91, %v34
  %vm94 = vsmask.f32 7424
  %v96 = vshrl.u32 %v92, 16
  %v98 = vshll.u32 %v92, 16
  %v100 = vrot.slane %v98, 1
  %v101 = vor.u32 %v96, %v100
  %v103 = vshll.u32 %v93, 16
  %v105 = vrot.slane %v103, 1
  %v106 = vsel %vm94, %v101, %v105
  %v107 = vshrl.u32 %v93, 16
  %v109 = vor.u32 %v107, %v105
  %v112 = vand.u32 %v109, %v45
  %114 = vmatprep.subr.bf16.mxu0 0
  %115 = vmatpush1.bf16.msra.mxu0 0
  %116 = vmatprep.subr.bf16.mxu0 0
  %117 = vmatpush1.bf16.msra.mxu0 0
  %118 = vmatprep.subr.bf16.mxu0 0
  %119 = vmatpush1.bf16.msra.mxu0 0
  %120 = vmatprep.subr.bf16.mxu0 0
  %121 = vmatpush1.bf16.msra.mxu0 0
  %122 = vmatprep.subr.bf16.mxu0 0
  %123 = vmatpush1.bf16.msra.mxu0 0
  %124 = vmatprep.subr.bf16.mxu0 0
  %125 = vmatpush1.bf16.msra.mxu0 0
  %126 = vmatprep.subr.bf16.mxu0 0
  %127 = vmatpush1.bf16.msra.mxu0 %v112
  %128 = vmatprep.subr.bf16.mxu0 0
  %129 = vmatpush1.bf16.msra.mxu0 %v106
  %130 = vmatprep.subr.bf16.mxu0 0
  %131 = vmatpush2.bf16.msra.mxu0 0
  %132 = vmatprep.subr.bf16.mxu0 0
  %133 = vmatpush2.bf16.msra.mxu0 0
  %134 = vmatprep.subr.bf16.mxu0 0
  %135 = vmatpush2.bf16.msra.mxu0 0
  %136 = vmatprep.subr.bf16.mxu0 0
  %137 = vmatpush2.bf16.msra.mxu0 0
  %138 = vmatprep.subr.bf16.mxu0 0
  %139 = vmatpush2.bf16.msra.mxu0 0
  %140 = vmatprep.subr.bf16.mxu0 0
  %141 = vmatpush2.bf16.msra.mxu0 0
  %142 = vmatprep.subr.bf16.mxu0 0
  %143 = vmatpush2.bf16.msra.mxu0 0
  %144 = vmatprep.subr.bf16.mxu0 0
  %145 = vmatpush2.bf16.msra.mxu0 0
  %146 = vmatprep.mubr.bf16.mxu0 0
  %147 = vmatmul.mubr.bf16.gmra.mxu0 %v40
  %v148 = vpop.f32.mrf.mxu0
  %v149 = vadd.f32 0.0, %v148
  %v150 = vpop.f32.mrf.mxu0
  %v151 = vpop.f32.mrf.mxu0
  %v152 = vadd.f32 0.0, %v151
  %v153 = vpop.f32.mrf.mxu0
  %154 = vdwg.mxu0
  %v155 = vmax.f32 %v84, %v149
  %v156 = vmax.f32 %v87, %v152
  %s157 = scalar_lea.vmem %s0, 20
  %v158 = vld [vmem:[%s157] sm:$0xf]
  %v159 = vld [vmem:[%s157 + $0x4] sm:$0xf]
  %v160 = vld [vmem:[%s157 + $0x8] sm:$0xf]
  %v161 = vld [vmem:[%s157 + $0xc] sm:$0xf]
  %v162 = vld [vmem:[%s157 + $0x10] sm:$0x3]
  %v167 = vunpack.c.l.b16 %v158
  %v168 = vunpack.c.l.b16 %v159
  %v169 = vunpack.c.l.b16 %v160
  %v170 = vunpack.c.l.b16 %v161
  %v171 = vpack.c.b16 %v168, %v167
  %v172 = vpack.c.b16 %v170, %v169
  %v175 = vand.u32 %v172, %v45
  %177 = vmatprep.subr.bf16.mxu0 0
  %178 = vmatpush1.bf16.msra.mxu0 0
  %179 = vmatprep.subr.bf16.mxu0 0
  %180 = vmatpush1.bf16.msra.mxu0 0
  %181 = vmatprep.subr.bf16.mxu0 0
  %182 = vmatpush1.bf16.msra.mxu0 0
  %183 = vmatprep.subr.bf16.mxu0 0
  %184 = vmatpush1.bf16.msra.mxu0 0
  %185 = vmatprep.subr.bf16.mxu0 0
  %186 = vmatpush1.bf16.msra.mxu0 0
  %187 = vmatprep.subr.bf16.mxu0 0
  %188 = vmatpush1.bf16.msra.mxu0 0
  %189 = vmatprep.subr.bf16.mxu0 0
  %190 = vmatpush1.bf16.msra.mxu0 %v175
  %191 = vmatprep.subr.bf16.mxu0 0
  %192 = vmatpush1.bf16.msra.mxu0 %v171
  %193 = vmatprep.subr.bf16.mxu0 0
  %194 = vmatpush2.bf16.msra.mxu0 0
  %195 = vmatprep.subr.bf16.mxu0 0
  %196 = vmatpush2.bf16.msra.mxu0 0
  %197 = vmatprep.subr.bf16.mxu0 0
  %198 = vmatpush2.bf16.msra.mxu0 0
  %199 = vmatprep.subr.bf16.mxu0 0
  %200 = vmatpush2.bf16.msra.mxu0 0
  %201 = vmatprep.subr.bf16.mxu0 0
  %202 = vmatpush2.bf16.msra.mxu0 0
  %203 = vmatprep.subr.bf16.mxu0 0
  %204 = vmatpush2.bf16.msra.mxu0 0
  %205 = vmatprep.subr.bf16.mxu0 0
  %206 = vmatpush2.bf16.msra.mxu0 0
  %207 = vmatprep.subr.bf16.mxu0 0
  %208 = vmatpush2.bf16.msra.mxu0 0
  %209 = vmatprep.mubr.bf16.mxu0 0
  %210 = vmatmul.mubr.bf16.gmra.mxu0 %v40
  %v211 = vpop.f32.mrf.mxu0
  %v212 = vadd.f32 0.0, %v211
  %v213 = vpop.f32.mrf.mxu0
  %v214 = vpop.f32.mrf.mxu0
  %v215 = vadd.f32 0.0, %v214
  %v216 = vpop.f32.mrf.mxu0
  %217 = vdwg.mxu0
  %v218 = vmax.f32 %v155, %v212
  %v219 = vmax.f32 %v156, %v215
  %v221 = vunpack.c.l.b16 %v162
  %v222 = vpack.c.b16 %v169, %v168
  %v223 = vpack.c.b16 %v221, %v170
  %v225 = vshrl.u32 %v222, 16
  %v227 = vshll.u32 %v222, 16
  %v229 = vrot.slane %v227, 1
  %v230 = vor.u32 %v225, %v229
  %v232 = vshll.u32 %v223, 16
  %v234 = vrot.slane %v232, 1
  %v235 = vsel %vm94, %v230, %v234
  %v236 = vshrl.u32 %v223, 16
  %v238 = vor.u32 %v236, %v234
  %v241 = vand.u32 %v238, %v45
  %243 = vmatprep.subr.bf16.mxu0 0
  %244 = vmatpush1.bf16.msra.mxu0 0
  %245 = vmatprep.subr.bf16.mxu0 0
  %246 = vmatpush1.bf16.msra.mxu0 0
  %247 = vmatprep.subr.bf16.mxu0 0
  %248 = vmatpush1.bf16.msra.mxu0 0
  %249 = vmatprep.subr.bf16.mxu0 0
  %250 = vmatpush1.bf16.msra.mxu0 0
  %251 = vmatprep.subr.bf16.mxu0 0
  %252 = vmatpush1.bf16.msra.mxu0 0
  %253 = vmatprep.subr.bf16.mxu0 0
  %254 = vmatpush1.bf16.msra.mxu0 0
  %255 = vmatprep.subr.bf16.mxu0 0
  %256 = vmatpush1.bf16.msra.mxu0 %v241
  %257 = vmatprep.subr.bf16.mxu0 0
  %258 = vmatpush1.bf16.msra.mxu0 %v235
  %259 = vmatprep.subr.bf16.mxu0 0
  %260 = vmatpush2.bf16.msra.mxu0 0
  %261 = vmatprep.subr.bf16.mxu0 0
  %262 = vmatpush2.bf16.msra.mxu0 0
  %263 = vmatprep.subr.bf16.mxu0 0
  %264 = vmatpush2.bf16.msra.mxu0 0
  %265 = vmatprep.subr.bf16.mxu0 0
  %266 = vmatpush2.bf16.msra.mxu0 0
  %267 = vmatprep.subr.bf16.mxu0 0
  %268 = vmatpush2.bf16.msra.mxu0 0
  %269 = vmatprep.subr.bf16.mxu0 0
  %270 = vmatpush2.bf16.msra.mxu0 0
  %271 = vmatprep.subr.bf16.mxu0 0
  %272 = vmatpush2.bf16.msra.mxu0 0
  %273 = vmatprep.subr.bf16.mxu0 0
  %274 = vmatpush2.bf16.msra.mxu0 0
  %275 = vmatprep.mubr.bf16.mxu0 0
  %276 = vmatmul.mubr.bf16.gmra.mxu0 %v40
  %v277 = vpop.f32.mrf.mxu0
  %v278 = vadd.f32 0.0, %v277
  %v279 = vpop.f32.mrf.mxu0
  %v280 = vpop.f32.mrf.mxu0
  %v281 = vadd.f32 0.0, %v280
  %v282 = vpop.f32.mrf.mxu0
  %283 = vdwg.mxu0
  %v284 = vmax.f32 %v218, %v278
  %v285 = vmax.f32 %v219, %v281
  %v286 = vld [vmem:[%s2] sm:$0xff]
  %v287 = vld [vmem:[%s2 + $0x8] sm:$0xff]
  %289 = vset.pattern.permute.xlu0 0
  %290 = vperm.xlu0 %289, %v286
  %v291 = vpop.permute.xlu0 %290
  %294 = vset.pattern.permute.xlu0 0
  %295 = vperm.xlu0 %294, %v287
  %v296 = vpop.permute.xlu0 %295
  %v298 = vadd.f32 %v284, %v291
  %v299 = vadd.f32 %v285, %v296
  %v300 = vmax.f32 %v298, 0.0
  %v301 = vmax.f32 %v299, 0.0
  %302 = vst [vmem:[%s3] sm:$0xff] %v300
  %303 = vst [vmem:[%s3 + $0x8] sm:$0xff] %v301
  // Predicated region
  $region14: #{convnet_forward.1} parent=0 // pred_check
    _
  $region15: #{convnet_forward.1} parent=0 // pred_check_branch
    %305 = sbr.rel (0) target = $region17
  $region16: #{convnet_forward.1} parent=0 // pred_region
    _
  $region17: #{convnet_forward.1} parent=0 // pred_fallthru
    _
  // Predicated region
  $region18: #{convnet_forward.1} parent=0 // pred_check
    _
  $region19: #{convnet_forward.1} parent=0 // pred_check_branch
    %307 = sbr.rel (0) target = $region21
  $region20: #{convnet_forward.1} parent=0 // pred_region
    _
  $region21: #{convnet_forward.1} parent=0 // pred_fallthru
    _

</llo_original>
